<compile_context>
chip_gen: v5e
topology: v5e:2x2
jax: 0.10.0
libtpu: 0.0.40
codegen_flags: <defaults>
</compile_context>

<pallas_src>
import functools

import jax
import jax.numpy as jnp
from jax.experimental import pallas as pl
from jax.experimental.pallas import tpu as pltpu
import numpy as np


def _round_up(x, m):
    return ((x + m - 1) // m) * m


def span_classification_kernel(x_ref, w1_ref, b1_ref, w2_ref, b2_ref, out_ref):
    # x_ref : (tn, D)   bf16  streamed span tile (D = exact input_dim)
    # w1_ref: (D,  Hp)  bf16  resident weights (pre-transposed: in x out)
    # b1_ref: (1,  Hp)  f32
    # w2_ref: (Hp, Lp)  bf16  resident, column 0 pre-zeroed
    # b2_ref: (1,  Lp)  f32   lane 0 pre-zeroed
    # out_ref:(tn, Lp)  f32
    h = jnp.dot(x_ref[...], w1_ref[...], preferred_element_type=jnp.float32)
    h = jnp.maximum(h + b1_ref[...], 0.0)                              # ReLU
    s = jnp.dot(h.astype(w2_ref.dtype), w2_ref[...],
                preferred_element_type=jnp.float32)
    out_ref[...] = (s + b2_ref[...]).astype(out_ref.dtype)             # col 0 == 0


@functools.partial(jax.jit, static_argnames=("tile_n",))
def span_classification(span_repr, params, tile_n=512):
    """span_repr: (num_spans, input_dim) -> (num_spans, num_labels) f32."""
    w1 = params["w1"]          # (input_dim, hidden_dim)
    b1 = params["b1"]          # (hidden_dim,)
    w2 = params["w2"]          # (hidden_dim, num_labels)
    b2 = params["b2"]          # (num_labels,)

    n, d = span_repr.shape
    hd = w1.shape[1]
    nl = w2.shape[1]

    # Lane-align only the (tiny) hidden / label dims; K (= input_dim) stays exact.
    hp = _round_up(hd, 128)
    lp = _round_up(nl, 128)

    # bf16 matmul operands (f32 accumulation in-kernel); biases stay f32.
    x = span_repr.astype(jnp.bfloat16)
    w1_p = jnp.zeros((d, hp), jnp.bfloat16).at[:, :hd].set(w1.astype(jnp.bfloat16))
    b1_p = jnp.zeros((1, hp), jnp.float32).at[0, :hd].set(b1.astype(jnp.float32))
    # Fold `scores[:, 0] = 0` into the weights: zero W2[:, 0] and b2[0].
    w2_p = (jnp.zeros((hp, lp), jnp.bfloat16)
            .at[:hd, :nl].set(w2.astype(jnp.bfloat16))
            .at[:, 0].set(0.0))
    b2_p = (jnp.zeros((1, lp), jnp.float32)
            .at[0, :nl].set(b2.astype(jnp.float32))
            .at[0, 0].set(0.0))

    # ---- span-tile selection ------------------------------------------------
    x_row_b = d * 2                      # bf16 x row bytes
    out_row_b = lp * 4                   # f32 output row bytes
    weight_b = (d * hp + hp * lp) * 2 + (hp + lp) * 4
    vmem_budget = 24 * 1024 * 1024       # fits v7x's 32 MiB scoped default
    avail = max(vmem_budget - weight_b, 16 * (x_row_b + out_row_b))
    tn_vmem = max(8, (avail // (2 * (x_row_b + out_row_b))) // 8 * 8)
    tn_split = _round_up(-(-n // 2), 8)  # >= 2 grid steps when n > 8 (v7x dual-TC)
    tn = max(8, min(tile_n, tn_vmem, tn_split))

    grid = (pl.cdiv(n, tn),)             # ragged last block: OOB rows never stored

    cost = pl.CostEstimate(
        flops=2 * n * d * hp + 2 * n * hp * lp,
        transcendentals=0,
        bytes_accessed=n * x_row_b + weight_b + n * out_row_b,
    )

    out = pl.pallas_call(
        span_classification_kernel,
        out_shape=jax.ShapeDtypeStruct((n, lp), jnp.float32),
        grid_spec=pltpu.PrefetchScalarGridSpec(
            num_scalar_prefetch=0,
            grid=grid,
            in_specs=[
                pl.BlockSpec((tn, d), lambda i: (i, 0)),    # streamed span tile
                pl.BlockSpec((d, hp), lambda i: (0, 0)),    # resident weights
                pl.BlockSpec((1, hp), lambda i: (0, 0)),
                pl.BlockSpec((hp, lp), lambda i: (0, 0)),
                pl.BlockSpec((1, lp), lambda i: (0, 0)),
            ],
            out_specs=pl.BlockSpec((tn, lp), lambda i: (i, 0)),
        ),
        compiler_params=pltpu.CompilerParams(
            dimension_semantics=("parallel",),
        ),
        cost_estimate=cost,
    )(x, w1_p, b1_p, w2_p, b2_p)

    # Padded label columns are exact zeros; slice them off (rows are already n).
    return out[:, :nl]


def reference_forward(span_repr, params):
    """Pure-JAX f32 reference matching the PyTorch module's forward."""
    h = jnp.maximum(span_repr @ params["w1"] + params["b1"], 0.0)
    s = h @ params["w2"] + params["b2"]
    return s.at[:, 0].set(0.0)


def init_params(key, input_dim, hidden_dim, num_labels):
    k1, k2, k3, k4 = jax.random.split(key, 4)
    s1 = 1.0 / np.sqrt(input_dim)
    s2 = 1.0 / np.sqrt(hidden_dim)
    # Weights stored pre-transposed relative to PyTorch nn.Linear: (in, out).
    return {
        "w1": jax.random.uniform(k1, (input_dim, hidden_dim), jnp.float32, -s1, s1),
        "b1": jax.random.uniform(k2, (hidden_dim,), jnp.float32, -s1, s1),
        "w2": jax.random.uniform(k3, (hidden_dim, num_labels), jnp.float32, -s2, s2),
        "b2": jax.random.uniform(k4, (num_labels,), jnp.float32, -s2, s2),
    }


if __name__ == "__main__":
    key = jax.random.PRNGKey(0)
    hidden_size = 32                 # word-representation hidden size
    input_dim = 2 * hidden_size      # span_representations: (num_spans, 2*hidden)
    hidden_dim = 32                  # feedforward hidden
    num_labels = 4
    num_spans = 10                   # not a multiple of 8 -> exercises ragged block

    kp, kx = jax.random.split(key)
    params = init_params(kp, input_dim, hidden_dim, num_labels)
    span_repr = jax.random.normal(kx, (num_spans, input_dim), jnp.float32)

    out = jax.block_until_ready(span_classification(span_repr, params))
    ref = jax.block_until_ready(reference_forward(span_repr, params))

    # bf16 matmul operands vs f32 reference -> relaxed tolerance.
    np.testing.assert_allclose(np.asarray(out), np.asarray(ref),
                               rtol=2e-2, atol=2e-2)
    assert out.shape == (num_spans, num_labels)
    assert np.all(np.asarray(out)[:, 0] == 0.0)
    print("KERNEL_OK")
</pallas_src>

<mosaic_0001>
module attributes {stable_mosaic.version = 11 : i64} {
  func.func @span_classification_kernel(%arg0: i32, %arg1: memref<8x64xbf16, #tpu.memory_space<vmem>>, %arg2: memref<64x128xbf16, #tpu.memory_space<vmem>>, %arg3: memref<1x128xf32, #tpu.memory_space<vmem>>, %arg4: memref<128x128xbf16, #tpu.memory_space<vmem>>, %arg5: memref<1x128xf32, #tpu.memory_space<vmem>>, %arg6: memref<8x128xf32, #tpu.memory_space<vmem>>) attributes {dimension_semantics = [#tpu.dimension_semantics<parallel>], iteration_bounds = array<i64: 2>, scalar_prefetch = 0 : i64, scratch_operands = 0 : i64, tpu.core_type = #tpu.core_type<tc>, window_params = [{transform_indices = @transform_0, window_bounds = array<i64: 8, 64>}, {pipeline_mode = #tpu.pipeline_mode<synchronous>, transform_indices = @transform_1, window_bounds = array<i64: 64, 128>}, {pipeline_mode = #tpu.pipeline_mode<synchronous>, transform_indices = @transform_2, window_bounds = array<i64: 1, 128>}, {pipeline_mode = #tpu.pipeline_mode<synchronous>, transform_indices = @transform_3, window_bounds = array<i64: 128, 128>}, {pipeline_mode = #tpu.pipeline_mode<synchronous>, transform_indices = @transform_4, window_bounds = array<i64: 1, 128>}, {transform_indices = @transform_5, window_bounds = array<i64: 8, 128>}]} {
    %c0 = arith.constant 0 : index
    %c0_0 = arith.constant 0 : index
    %0 = vector.load %arg1[%c0, %c0_0] : memref<8x64xbf16, #tpu.memory_space<vmem>>, vector<8x64xbf16>
    %c0_1 = arith.constant 0 : index
    %c0_2 = arith.constant 0 : index
    %1 = vector.load %arg2[%c0_1, %c0_2] : memref<64x128xbf16, #tpu.memory_space<vmem>>, vector<64x128xbf16>
    %cst = arith.constant dense<0.000000e+00> : vector<8x128xf32>
    %2 = tpu.matmul %0, %1, %cst {dimension_numbers = #tpu.dot_dimension_numbers<[1], [0], [0], [1], [0, 0, 1, 1], [], []>} : vector<8x64xbf16>, vector<64x128xbf16>, vector<8x128xf32> -> vector<8x128xf32>
    %c0_3 = arith.constant 0 : index
    %c0_4 = arith.constant 0 : index
    %3 = vector.load %arg3[%c0_3, %c0_4] : memref<1x128xf32, #tpu.memory_space<vmem>>, vector<1x128xf32>
    %4 = vector.broadcast %3 : vector<1x128xf32> to vector<8x128xf32>
    %5 = arith.addf %2, %4 : vector<8x128xf32>
    %cst_5 = arith.constant 0.000000e+00 : f32
    %6 = vector.broadcast %cst_5 : f32 to vector<8x128xf32>
    %7 = arith.maximumf %5, %6 : vector<8x128xf32>
    %8 = arith.truncf %7 : vector<8x128xf32> to vector<8x128xbf16>
    %c0_6 = arith.constant 0 : index
    %c0_7 = arith.constant 0 : index
    %9 = vector.load %arg4[%c0_6, %c0_7] : memref<128x128xbf16, #tpu.memory_space<vmem>>, vector<128x128xbf16>
    %cst_8 = arith.constant dense<0.000000e+00> : vector<8x128xf32>
    %10 = tpu.matmul %8, %9, %cst_8 {dimension_numbers = #tpu.dot_dimension_numbers<[1], [0], [0], [1], [0, 0, 1, 1], [], []>} : vector<8x128xbf16>, vector<128x128xbf16>, vector<8x128xf32> -> vector<8x128xf32>
    %c0_9 = arith.constant 0 : index
    %c0_10 = arith.constant 0 : index
    %11 = vector.load %arg5[%c0_9, %c0_10] : memref<1x128xf32, #tpu.memory_space<vmem>>, vector<1x128xf32>
    %12 = vector.broadcast %11 : vector<1x128xf32> to vector<8x128xf32>
    %13 = arith.addf %10, %12 : vector<8x128xf32>
    %c0_11 = arith.constant 0 : index
    %c0_12 = arith.constant 0 : index
    %14 = vector.load %arg6[%c0_11, %c0_12] : memref<8x128xf32, #tpu.memory_space<vmem>>, vector<8x128xf32>
    tpu.vector_store %arg6[%c0_11, %c0_12], %13 {strides = array<i32>} : memref<8x128xf32, #tpu.memory_space<vmem>>, vector<8x128xf32>,
    return
  }
  func.func @transform_0(%arg0: i32) -> (i32, i32) {
    %c0_i32 = arith.constant 0 : i32
    %c0_i32_0 = arith.constant 0 : i32
    return %arg0, %c0_i32 : i32, i32
  }
  func.func @transform_1(%arg0: i32) -> (i32, i32) {
    %c0_i32 = arith.constant 0 : i32
    %c0_i32_0 = arith.constant 0 : i32
    %c0_i32_1 = arith.constant 0 : i32
    return %c0_i32, %c0_i32_0 : i32, i32
  }
  func.func @transform_2(%arg0: i32) -> (i32, i32) {
    %c0_i32 = arith.constant 0 : i32
    %c0_i32_0 = arith.constant 0 : i32
    %c0_i32_1 = arith.constant 0 : i32
    return %c0_i32, %c0_i32_0 : i32, i32
  }
  func.func @transform_3(%arg0: i32) -> (i32, i32) {
    %c0_i32 = arith.constant 0 : i32
    %c0_i32_0 = arith.constant 0 : i32
    %c0_i32_1 = arith.constant 0 : i32
    return %c0_i32, %c0_i32_0 : i32, i32
  }
  func.func @transform_4(%arg0: i32) -> (i32, i32) {
    %c0_i32 = arith.constant 0 : i32
    %c0_i32_0 = arith.constant 0 : i32
    %c0_i32_1 = arith.constant 0 : i32
    return %c0_i32, %c0_i32_0 : i32, i32
  }
  func.func @transform_5(%arg0: i32) -> (i32, i32) {
    %c0_i32 = arith.constant 0 : i32
    %c0_i32_0 = arith.constant 0 : i32
    return %arg0, %c0_i32 : i32, i32
  }
}

</mosaic_0001>

<llo_original>
// kernel: span_classification.1
$region0: #{span_classification.1}
  #allocation0 [shape = 'u32[]', space=smem, size = 0x4, offset = 0x4, fixed_abs, tag = 'smem constant byte address 0x4 - core index']
  #allocation1 [shape = 'u32[72,128]{1,0:T(1,128)}', space=vmem, size = 0x9000, scoped, tag = 'internal scratch']
  %s0 = inlined_call_operand.vmem [shape: bf16[10,64], index: 0, kind: input, shape index: {}]
  %s1 = inlined_call_operand.vmem [shape: bf16[64,128], index: 1, kind: input, shape index: {}]
  %s2 = inlined_call_operand.vmem [shape: f32[1,128], index: 2, kind: input, shape index: {}]
  %s3 = inlined_call_operand.vmem [shape: bf16[128,128], index: 3, kind: input, shape index: {}]
  %s4 = inlined_call_operand.vmem [shape: f32[1,128], index: 4, kind: input, shape index: {}]
  %s5 = inlined_call_operand.vmem [shape: f32[10,128], index: 5, kind: output, shape index: {}]
  %s6 = sld [smem:[#allocation0]]
  $region53: #{span_classification.1} parent=0
    _
  %s8 = ssub.s32 1, %s6
  %s9 = scalar_select 0, %s8, %s6
  loop: start=0, step=1, limit=4
  $region2: #{span_classification.1} parent=0 // loop_pre_header
    _
  $region3: #{span_classification.1} parent=0 // loop_header
    %s11 = sphi 0, %s15
    %p12 = scmp.ge.s32.totalorder %s11, 4
    %s21 = sphi 0, %s23
    %s24 = sphi 0, %s21
    %s25 = sphi 0, %s24
    %s41 = sphi 0, %s25
    %s45 = sphi 0, %s45
    %s47 = sphi 0, %s45
    %s48 = sphi 0, %s47
    %s62 = sphi 0, %s48
    %s66 = sphi 0, %s66
    %s68 = sphi 0, %s66
    %s69 = sphi 0, %s68
    %s83 = sphi 0, %s69
    %s87 = sphi 0, %s87
    %s89 = sphi 0, %s87
    %s90 = sphi 0, %s89
    %s104 = sphi 0, %s90
    %s108 = sphi 0, %s108
    %s110 = sphi 0, %s108
    %s111 = sphi 0, %s110
    %s125 = sphi 0, %s111
    %s131 = sphi 0, %s133
    %s134 = sphi 0, %s131
    %s135 = sphi 0, %s134
    %s151 = sphi 0, %s135
  $region4: #{span_classification.1} parent=0 // loop_header_branch
    %14 = sbr.rel (%p12) target = $region8
  $region5: #{span_classification.1} parent=0 // loop_body
    %s16 = ssub.s32 %s11, 1
    %s17 = ssub.s32 %s11, 2
    %s18 = sadd.s32 %s11, 1
    %s19 = ssub.s32 %s11, %s18
    %p20 = scmp.eq.s32.totalorder %s19, 0
    %s22 = sadd.s32 %s21, 1
    %s23 = scalar_select %p20, %s21, %s22
    %p26 = pneg %p20
    %p27 = scmp.eq.s32.totalorder %s11, 1
    %p28 = por %p26, %p27
    %p29 = scmp.ne.s32.totalorder %s21, %s24
    %p30 = scmp.eq.s32.totalorder %s11, 0
    %p31 = por %p29, %p30
    %p32 = scmp.ne.s32.totalorder %s21, %s24
    %p33 = scmp.eq.s32.totalorder %s16, 1
    %p34 = por %p32, %p33
    %p35 = scmp.ne.s32.totalorder %s24, %s25
    %p36 = scmp.eq.s32.totalorder %s16, 0
    %p37 = por %p35, %p36
    %p38 = scmp.ne.s32.totalorder %s24, %s25
    %p39 = scmp.eq.s32.totalorder %s17, 1
    %p40 = por %p38, %p39
    %p42 = scmp.ne.s32.totalorder %s25, %s41
    %p43 = scmp.eq.s32.totalorder %s17, 0
    %p44 = por %p42, %p43
    %s46 = sadd.s32 %s45, 1
    %p49 = scmp.eq.s32.totalorder %s11, 1
    %p50 = scmp.ne.s32.totalorder %s45, %s47
    %p51 = scmp.eq.s32.totalorder %s11, 0
    %p52 = por %p50, %p51
    %p53 = scmp.ne.s32.totalorder %s45, %s47
    %p54 = scmp.eq.s32.totalorder %s16, 1
    %p55 = por %p53, %p54
    %p56 = scmp.ne.s32.totalorder %s47, %s48
    %p57 = scmp.eq.s32.totalorder %s16, 0
    %p58 = por %p56, %p57
    %p59 = scmp.ne.s32.totalorder %s47, %s48
    %p60 = scmp.eq.s32.totalorder %s17, 1
    %p61 = por %p59, %p60
    %p63 = scmp.ne.s32.totalorder %s48, %s62
    %p64 = scmp.eq.s32.totalorder %s17, 0
    %p65 = por %p63, %p64
    %s67 = sadd.s32 %s66, 1
    %p70 = scmp.eq.s32.totalorder %s11, 1
    %p71 = scmp.ne.s32.totalorder %s66, %s68
    %p72 = scmp.eq.s32.totalorder %s11, 0
    %p73 = por %p71, %p72
    %p74 = scmp.ne.s32.totalorder %s66, %s68
    %p75 = scmp.eq.s32.totalorder %s16, 1
    %p76 = por %p74, %p75
    %p77 = scmp.ne.s32.totalorder %s68, %s69
    %p78 = scmp.eq.s32.totalorder %s16, 0
    %p79 = por %p77, %p78
    %p80 = scmp.ne.s32.totalorder %s68, %s69
    %p81 = scmp.eq.s32.totalorder %s17, 1
    %p82 = por %p80, %p81
    %p84 = scmp.ne.s32.totalorder %s69, %s83
    %p85 = scmp.eq.s32.totalorder %s17, 0
    %p86 = por %p84, %p85
    %s88 = sadd.s32 %s87, 1
    %p91 = scmp.eq.s32.totalorder %s11, 1
    %p92 = scmp.ne.s32.totalorder %s87, %s89
    %p93 = scmp.eq.s32.totalorder %s11, 0
    %p94 = por %p92, %p93
    %p95 = scmp.ne.s32.totalorder %s87, %s89
    %p96 = scmp.eq.s32.totalorder %s16, 1
    %p97 = por %p95, %p96
    %p98 = scmp.ne.s32.totalorder %s89, %s90
    %p99 = scmp.eq.s32.totalorder %s16, 0
    %p100 = por %p98, %p99
    %p101 = scmp.ne.s32.totalorder %s89, %s90
    %p102 = scmp.eq.s32.totalorder %s17, 1
    %p103 = por %p101, %p102
    %p105 = scmp.ne.s32.totalorder %s90, %s104
    %p106 = scmp.eq.s32.totalorder %s17, 0
    %p107 = por %p105, %p106
    %s109 = sadd.s32 %s108, 1
    %p112 = scmp.eq.s32.totalorder %s11, 1
    %p113 = scmp.ne.s32.totalorder %s108, %s110
    %p114 = scmp.eq.s32.totalorder %s11, 0
    %p115 = por %p113, %p114
    %p116 = scmp.ne.s32.totalorder %s108, %s110
    %p117 = scmp.eq.s32.totalorder %s16, 1
    %p118 = por %p116, %p117
    %p119 = scmp.ne.s32.totalorder %s110, %s111
    %p120 = scmp.eq.s32.totalorder %s16, 0
    %p121 = por %p119, %p120
    %p122 = scmp.ne.s32.totalorder %s110, %s111
    %p123 = scmp.eq.s32.totalorder %s17, 1
    %p124 = por %p122, %p123
    %p126 = scmp.ne.s32.totalorder %s111, %s125
    %p127 = scmp.eq.s32.totalorder %s17, 0
    %p128 = por %p126, %p127
    %s129 = ssub.s32 %s11, %s18
    %p130 = scmp.eq.s32.totalorder %s129, 0
    %s132 = sadd.s32 %s131, 1
    %s133 = scalar_select %p130, %s131, %s132
    %p136 = pneg %p130
    %p137 = scmp.eq.s32.totalorder %s11, 1
    %p138 = por %p136, %p137
    %p139 = scmp.ne.s32.totalorder %s131, %s134
    %p140 = scmp.eq.s32.totalorder %s11, 0
    %p141 = por %p139, %p140
    %p142 = scmp.ne.s32.totalorder %s131, %s134
    %p143 = scmp.eq.s32.totalorder %s16, 1
    %p144 = por %p142, %p143
    %p145 = scmp.ne.s32.totalorder %s134, %s135
    %p146 = scmp.eq.s32.totalorder %s16, 0
    %p147 = por %p145, %p146
    %p148 = scmp.ne.s32.totalorder %s134, %s135
    %p149 = scmp.eq.s32.totalorder %s17, 1
    %p150 = por %p148, %p149
    %p152 = scmp.ne.s32.totalorder %s135, %s151
    %p153 = scmp.eq.s32.totalorder %s17, 0
    %p154 = por %p152, %p153
    %p155 = scmp.le.s32.totalorder 1, %s11
    %p156 = scmp.lt.s32.totalorder %s11, 3
    %p157 = pnand %p155, %p156
    %p158 = pneg %p157
    // Predicated region
    $region9: #{span_classification.1} parent=5 // pred_check
      _
    $region10: #{span_classification.1} parent=5 // pred_check_branch
      %160 = sbr.rel (%p157) target = $region12
    $region11: #{span_classification.1} parent=5 // pred_region
      %s161 = ssub.s32 %s11, 1
      // Predicated region
      $region13: #{span_classification.1} parent=11 // pred_check
        %p162 = pneg %p58
      $region14: #{span_classification.1} parent=11 // pred_check_branch
        %164 = sbr.rel (%p162) target = $region16
      $region15: #{span_classification.1} parent=11 // pred_region
        _
      $region16: #{span_classification.1} parent=11 // pred_fallthru
        _
      // Predicated region
      $region17: #{span_classification.1} parent=11 // pred_check
        %p165 = pneg %p79
      $region18: #{span_classification.1} parent=11 // pred_check_branch
        %167 = sbr.rel (%p165) target = $region20
      $region19: #{span_classification.1} parent=11 // pred_region
        _
      $region20: #{span_classification.1} parent=11 // pred_fallthru
        _
      // Predicated region
      $region21: #{span_classification.1} parent=11 // pred_check
        %p168 = pneg %p100
      $region22: #{span_classification.1} parent=11 // pred_check_branch
        %170 = sbr.rel (%p168) target = $region24
      $region23: #{span_classification.1} parent=11 // pred_region
        _
      $region24: #{span_classification.1} parent=11 // pred_fallthru
        _
      // Predicated region
      $region25: #{span_classification.1} parent=11 // pred_check
        %p171 = pneg %p121
      $region26: #{span_classification.1} parent=11 // pred_check_branch
        %173 = sbr.rel (%p171) target = $region28
      $region27: #{span_classification.1} parent=11 // pred_region
        _
      $region28: #{span_classification.1} parent=11 // pred_fallthru
        _
    $region12: #{span_classification.1} parent=5 // pred_fallthru
      _
    %p174 = scmp.lt.s32.totalorder %s11, 2
    // Predicated region
    $region29: #{span_classification.1} parent=5 // pred_check
      %p175 = pneg %p174
    $region30: #{span_classification.1} parent=5 // pred_check_branch
      %177 = sbr.rel (%p175) target = $region32
    $region31: #{span_classification.1} parent=5 // pred_region
      // Predicated region
      $region33: #{span_classification.1} parent=31 // pred_check
        %p178 = pneg %p31
      $region34: #{span_classification.1} parent=31 // pred_check_branch
        %180 = sbr.rel (%p178) target = $region36
      $region35: #{span_classification.1} parent=31 // pred_region
        %p181 = scmp.lt.s32.totalorder %s11, 1
        %s182 = scalar_select %p181, %s11, 1
        %s183 = smul.addr %s182, 4
        %s184 = scalar_lea.vmem %s0, %s183
      $region36: #{span_classification.1} parent=31 // pred_fallthru
        _
    $region32: #{span_classification.1} parent=5 // pred_fallthru
      _
    %p185 = scmp.le.s32.totalorder 1, %s11
    %p186 = scmp.lt.s32.totalorder %s11, 3
    %p187 = pnand %p185, %p186
    %p188 = pneg %p187
    // Predicated region
    $region37: #{span_classification.1} parent=5 // pred_check
      _
    $region38: #{span_classification.1} parent=5 // pred_check_branch
      %190 = sbr.rel (%p187) target = $region40
    $region39: #{span_classification.1} parent=5 // pred_region
      %s191 = ssub.s32 %s11, 1
      %p192 = scmp.lt.s32.totalorder %s16, 1
      %s193 = scalar_select %p192, %s16, 1
      %s194 = smul.addr %s193, 4
      %s195 = scalar_lea.vmem %s0, %s194
      %p196 = pneg %p37
      %p197 = pneg %p34
      %p198 = pneg %p58
      %p199 = pneg %p55
      %p200 = pneg %p79
      %p201 = pneg %p76
      %p202 = pneg %p100
      %p203 = pneg %p97
      %p204 = pneg %p121
      %p205 = pneg %p118
      %p206 = pneg %p147
      %p207 = pneg %p144
      %p208 = scmp.lt.s32.totalorder %s16, 1
      %s209 = scalar_select %p208, %s16, 1
      %s210 = smul.addr %s209, 8
      %s211 = scalar_lea.vmem %s5, %s210
      %p212 = scmp.lt.s32.totalorder %s16, 1
      %s213 = scalar_select %p212, %s16, 1
      %s214 = smul.addr %s213, 4
      %s215 = scalar_lea.vmem %s0, %s214
      %p216 = scmp.lt.s32.totalorder %s16, 1
      %s217 = scalar_select %p216, %s16, 1
      %s218 = smul.addr %s217, 8
      %s219 = scalar_lea.vmem %s5, %s218
      %v221 = vld [vmem:[%s215] sm:$0xf]
      %v222 = vld [vmem:[%s1] sm:$0xf]
      %v223 = vld [vmem:[%s1 + $0x4] sm:$0xf]
      %v224 = vld [vmem:[%s1 + $0x8] sm:$0xf]
      %v225 = vld [vmem:[%s1 + $0xc] sm:$0xf]
      %v226 = vld [vmem:[%s1 + $0x10] sm:$0xf]
      %v227 = vld [vmem:[%s1 + $0x14] sm:$0xf]
      %v228 = vld [vmem:[%s1 + $0x18] sm:$0xf]
      %v229 = vld [vmem:[%s1 + $0x1c] sm:$0xf]
      %v230 = vld [vmem:[%s2] sm:$0x1]
      %v232 = vperm.slane %v230, 0
      %v242 = vunpack.c.l.b16 %v222
      %v243 = vunpack.c.l.b16 %v223
      %v244 = vunpack.c.l.b16 %v224
      %v245 = vunpack.c.l.b16 %v225
      %v246 = vunpack.c.l.b16 %v226
      %v247 = vunpack.c.l.b16 %v227
      %v248 = vunpack.c.l.b16 %v228
      %v249 = vunpack.c.l.b16 %v229
      %v250 = vpack.c.b16 %v243, %v242
      %v251 = vpack.c.b16 %v245, %v244
      %v252 = vpack.c.b16 %v247, %v246
      %v253 = vpack.c.b16 %v249, %v248
      %vm258 = vcmask 523264
      %v260 = vsel %vm258, %v221, 0
      %262 = vmatpush.bf16.msra.mxu0 0
      %263 = vmatpush.bf16.msra.mxu0 0
      %264 = vmatpush.bf16.msra.mxu0 0
      %265 = vmatpush.bf16.msra.mxu0 0
      %266 = vmatpush.bf16.msra.mxu0 %v253
      %267 = vmatpush.bf16.msra.mxu0 %v252
      %268 = vmatpush.bf16.msra.mxu0 %v251
      %269 = vmatpush.bf16.msra.mxu0 %v250
      %270 = vmatmul.bf16.gmra.mxu0 %v260
      %v271 = vpop.f32.mrf.mxu0
      %v272 = vadd.f32 %v232, %v271
      %v273 = vpop.f32.mrf.mxu0
      %274 = vdwg.mxu0
      %v275 = vmax.f32 %v272, 0.0
      %v276 = vpack.c.bf16 %v275, %v275
      %v277 = vld [vmem:[%s3] sm:$0xf]
      %v278 = vld [vmem:[%s3 + $0x4] sm:$0xf]
      %v279 = vld [vmem:[%s3 + $0x8] sm:$0xf]
      %v280 = vld [vmem:[%s3 + $0xc] sm:$0xf]
      %v281 = vld [vmem:[%s3 + $0x10] sm:$0xf]
      %v282 = vld [vmem:[%s3 + $0x14] sm:$0xf]
      %v283 = vld [vmem:[%s3 + $0x18] sm:$0xf]
      %v284 = vld [vmem:[%s3 + $0x1c] sm:$0xf]
      %v285 = vld [vmem:[%s3 + $0x20] sm:$0xf]
      %v286 = vld [vmem:[%s3 + $0x24] sm:$0xf]
      %v287 = vld [vmem:[%s3 + $0x28] sm:$0xf]
      %v288 = vld [vmem:[%s3 + $0x2c] sm:$0xf]
      %v289 = vld [vmem:[%s3 + $0x30] sm:$0xf]
      %v290 = vld [vmem:[%s3 + $0x34] sm:$0xf]
      %v291 = vld [vmem:[%s3 + $0x38] sm:$0xf]
      %v292 = vld [vmem:[%s3 + $0x3c] sm:$0xf]
      %v293 = vld [vmem:[%s4] sm:$0x1]
      %v295 = vperm.slane %v293, 0
      %v313 = vunpack.c.l.b16 %v277
      %v314 = vunpack.c.l.b16 %v278
      %v315 = vunpack.c.l.b16 %v279
      %v316 = vunpack.c.l.b16 %v280
      %v317 = vunpack.c.l.b16 %v281
      %v318 = vunpack.c.l.b16 %v282
      %v319 = vunpack.c.l.b16 %v283
      %v320 = vunpack.c.l.b16 %v284
      %v321 = vunpack.c.l.b16 %v285
      %v322 = vunpack.c.l.b16 %v286
      %v323 = vunpack.c.l.b16 %v287
      %v324 = vunpack.c.l.b16 %v288
      %v325 = vunpack.c.l.b16 %v289
      %v326 = vunpack.c.l.b16 %v290
      %v327 = vunpack.c.l.b16 %v291
      %v328 = vunpack.c.l.b16 %v292
      %v329 = vpack.c.b16 %v314, %v313
      %v330 = vpack.c.b16 %v316, %v315
      %v331 = vpack.c.b16 %v318, %v317
      %v332 = vpack.c.b16 %v320, %v319
      %v333 = vpack.c.b16 %v322, %v321
      %v334 = vpack.c.b16 %v324, %v323
      %v335 = vpack.c.b16 %v326, %v325
      %v336 = vpack.c.b16 %v328, %v327
      %345 = vmatpush.bf16.msra.mxu0 %v336
      %346 = vmatpush.bf16.msra.mxu0 %v335
      %347 = vmatpush.bf16.msra.mxu0 %v334
      %348 = vmatpush.bf16.msra.mxu0 %v333
      %349 = vmatpush.bf16.msra.mxu0 %v332
      %350 = vmatpush.bf16.msra.mxu0 %v331
      %351 = vmatpush.bf16.msra.mxu0 %v330
      %352 = vmatpush.bf16.msra.mxu0 %v329
      %353 = vmatmul.bf16.gmra.mxu0 %v276
      %v354 = vpop.f32.mrf.mxu0
      %v355 = vadd.f32 %v295, %v354
      %v356 = vpop.f32.mrf.mxu0
      %357 = vdwg.mxu0
      %358 = vst [vmem:[%s219] sm:$0xff] %v355
      %p359 = scmp.lt.s32.totalorder %s16, 1
      %s360 = scalar_select %p359, %s16, 1
      %s361 = smul.addr %s360, 8
      %s362 = scalar_lea.vmem %s5, %s361
      // Predicated region
      $region41: #{span_classification.1} parent=39 // pred_check
        %p363 = pneg %p144
      $region42: #{span_classification.1} parent=39 // pred_check_branch
        %365 = sbr.rel (%p363) target = $region44
      $region43: #{span_classification.1} parent=39 // pred_region
        _
      $region44: #{span_classification.1} parent=39 // pred_fallthru
        _
    $region40: #{span_classification.1} parent=5 // pred_fallthru
      _
    %p366 = scmp.le.s32.totalorder 2, %s11
    // Predicated region
    $region45: #{span_classification.1} parent=5 // pred_check
      %p367 = pneg %p366
    $region46: #{span_classification.1} parent=5 // pred_check_branch
      %369 = sbr.rel (%p367) target = $region48
    $region47: #{span_classification.1} parent=5 // pred_region
      %s370 = ssub.s32 %s11, 2
      // Predicated region
      $region49: #{span_classification.1} parent=47 // pred_check
        %p371 = pneg %p150
      $region50: #{span_classification.1} parent=47 // pred_check_branch
        %373 = sbr.rel (%p371) target = $region52
      $region51: #{span_classification.1} parent=47 // pred_region
        %p374 = scmp.lt.s32.totalorder %s17, 1
        %s375 = scalar_select %p374, %s17, 1
        %s376 = smul.addr %s375, 8
        %s377 = scalar_lea.vmem %s5, %s376
      $region52: #{span_classification.1} parent=47 // pred_fallthru
        _
    $region48: #{span_classification.1} parent=5 // pred_fallthru
      _
  $region6: #{span_classification.1} parent=0 // loop_footer
    %s15 = sadd.s32 1, %s11
  $region7: #{span_classification.1} parent=0 // loop_footer_branch
    %10 = sbr.rel target = $region3
  $region8: #{span_classification.1} parent=0 // loop_exit
    _

</llo_original>
